<compile_context>
chip_gen: v5e
topology: v5e:2x2
jax: 0.10.0
libtpu: 0.0.40
codegen_flags: <defaults>
</compile_context>

<pallas_src>
import jax
import jax.numpy as jnp
from jax.experimental import pallas as pl
from jax.experimental.pallas import tpu as pltpu

D_IN, D_H1, D_H2, D_OUT = 8, 6, 4, 1
GRP = 128 // D_IN  # 16 samples packed per 128-lane row


def _block_diag(w, reps):
    """(kin, kout) -> (reps*kin, reps*kout) block-diagonal replication."""
    kin, kout = w.shape
    eye = jnp.eye(reps, dtype=w.dtype)
    return jnp.einsum("pq,ko->pkqo", eye, w).reshape(reps * kin, reps * kout)


def _sigmoid(z):
    # exp and reciprocal both live on the EUP slot (VALU stays free).
    return pl.reciprocal(1.0 + jnp.exp(-z), approx=True)


def mlp_kernel(x_ref, w1_ref, b1_ref, w2_ref, b2_ref, w3_ref, b3_ref, o_ref):
    # x_ref: (tile_rows, 128) VMEM block; each row holds 16 interleaved samples.
    x = x_ref[...]
    h1 = _sigmoid(
        jnp.dot(x, w1_ref[...], preferred_element_type=jnp.float32) + b1_ref[...])
    h2 = _sigmoid(
        jnp.dot(h1, w2_ref[...], preferred_element_type=jnp.float32) + b2_ref[...])
    y = _sigmoid(
        jnp.dot(h2, w3_ref[...], preferred_element_type=jnp.float32) + b3_ref[...])
    o_ref[...] = y  # (tile_rows, 16): one output per packed sample


def mlp_forward(x, w1, b1, w2, b2, w3, b3, *, tile_rows=4096):
    """x: (B, 8) f32; weights stored (in, out); biases 1-D. Returns (B, 1)."""
    B = x.shape[0]

    # Pack 16 samples per 128-lane row. When B % 16 == 0 this reshape is a
    # free bitcast (no extra HBM pass); otherwise pad a few rows once.
    B16 = -(-B // GRP) * GRP
    if B16 != B:
        x = jnp.pad(x, ((0, B16 - B), (0, 0)))
    R = B16 // GRP
    x_packed = x.reshape(R, GRP * D_IN)           # (R, 128)

    # Block-diagonal replicated weights: one MXU dot handles all 16 samples
    # interleaved in a row; lanes stay dense through all three layers.
    W1 = _block_diag(w1, GRP)                     # (128, 96)
    W2 = _block_diag(w2, GRP)                     # (96, 64)
    W3 = _block_diag(w3, GRP)                     # (64, 16)
    B1 = jnp.tile(b1, GRP)[None, :]               # (1, 96)
    B2 = jnp.tile(b2, GRP)[None, :]               # (1, 64)
    B3 = jnp.tile(b3, GRP)[None, :]               # (1, 16)

    tr = min(tile_rows, R)                        # full-array block if R is small
    grid = (pl.cdiv(R, tr),)

    const = lambda shape: pl.BlockSpec(shape, lambda i: (0, 0))  # resident in VMEM

    out_packed = pl.pallas_call(
        mlp_kernel,
        out_shape=jax.ShapeDtypeStruct((R, GRP * D_OUT), jnp.float32),
        grid=grid,
        in_specs=[
            pl.BlockSpec((tr, GRP * D_IN), lambda i: (i, 0)),   # batch-tiled input
            const(W1.shape), const(B1.shape),
            const(W2.shape), const(B2.shape),
            const(W3.shape), const(B3.shape),
        ],
        out_specs=pl.BlockSpec((tr, GRP * D_OUT), lambda i: (i, 0)),
        compiler_params=pltpu.CompilerParams(
            dimension_semantics=("parallel",),
            vmem_limit_bytes=32 * 1024 * 1024,
        ),
    )(x_packed, W1, B1, W2, B2, W3, B3)

    return out_packed.reshape(B16, D_OUT)[:B]     # (B, 1)


def init_linear_params(key, in_features, out_features):
    # Mimics PyTorch's default init: U(-1/sqrt(in), 1/sqrt(in)).
    kw, kb = jax.random.split(key)
    bound = 1.0 / jnp.sqrt(jnp.float32(in_features))
    w = jax.random.uniform(kw, (in_features, out_features), jnp.float32,
                           minval=-bound, maxval=bound)
    b = jax.random.uniform(kb, (out_features,), jnp.float32,
                           minval=-bound, maxval=bound)
    return w, b


if __name__ == "__main__":
    key = jax.random.PRNGKey(0)
    kx, k1, k2, k3 = jax.random.split(key, 4)

    B = 8  # small demo batch (packed/padded into one 128-lane row internally)
    x = jax.random.normal(kx, (B, D_IN), jnp.float32)

    w1, b1 = init_linear_params(k1, D_IN, D_H1)
    w2, b2 = init_linear_params(k2, D_H1, D_H2)
    w3, b3 = init_linear_params(k3, D_H2, D_OUT)

    out = mlp_forward(x, w1, b1, w2, b2, w3, b3)
    out = jax.block_until_ready(out)

    # Pure-JAX reference check (tolerance loosened slightly for the approx
    # EUP reciprocal used in the in-kernel sigmoid).
    ref = jax.nn.sigmoid(x @ w1 + b1)
    ref = jax.nn.sigmoid(ref @ w2 + b2)
    ref = jax.nn.sigmoid(ref @ w3 + b3)
    assert out.shape == (B, 1)
    assert jnp.allclose(out, ref, atol=5e-3, rtol=0.0), float(jnp.abs(out - ref).max())

    print("KERNEL_OK")
</pallas_src>

<mosaic_0001>
module attributes {stable_mosaic.version = 11 : i64} {
  func.func @mlp_kernel(%arg0: i32, %arg1: memref<1x128xf32, #tpu.memory_space<vmem>>, %arg2: memref<128x96xf32, #tpu.memory_space<vmem>>, %arg3: memref<1x96xf32, #tpu.memory_space<vmem>>, %arg4: memref<96x64xf32, #tpu.memory_space<vmem>>, %arg5: memref<1x64xf32, #tpu.memory_space<vmem>>, %arg6: memref<64x16xf32, #tpu.memory_space<vmem>>, %arg7: memref<1x16xf32, #tpu.memory_space<vmem>>, %arg8: memref<1x16xf32, #tpu.memory_space<vmem>>) attributes {dimension_semantics = [#tpu.dimension_semantics<parallel>], iteration_bounds = array<i64: 1>, scalar_prefetch = 0 : i64, scratch_operands = 0 : i64, tpu.core_type = #tpu.core_type<tc>, window_params = [{transform_indices = @transform_0, window_bounds = array<i64: 1, 128>}, {pipeline_mode = #tpu.pipeline_mode<synchronous>, transform_indices = @transform_1, window_bounds = array<i64: 128, 96>}, {pipeline_mode = #tpu.pipeline_mode<synchronous>, transform_indices = @transform_2, window_bounds = array<i64: 1, 96>}, {pipeline_mode = #tpu.pipeline_mode<synchronous>, transform_indices = @transform_3, window_bounds = array<i64: 96, 64>}, {pipeline_mode = #tpu.pipeline_mode<synchronous>, transform_indices = @transform_4, window_bounds = array<i64: 1, 64>}, {pipeline_mode = #tpu.pipeline_mode<synchronous>, transform_indices = @transform_5, window_bounds = array<i64: 64, 16>}, {pipeline_mode = #tpu.pipeline_mode<synchronous>, transform_indices = @transform_6, window_bounds = array<i64: 1, 16>}, {transform_indices = @transform_7, window_bounds = array<i64: 1, 16>}]} {
    %c0 = arith.constant 0 : index
    %c0_0 = arith.constant 0 : index
    %0 = vector.load %arg1[%c0, %c0_0] : memref<1x128xf32, #tpu.memory_space<vmem>>, vector<1x128xf32>
    %c0_1 = arith.constant 0 : index
    %c0_2 = arith.constant 0 : index
    %1 = vector.load %arg2[%c0_1, %c0_2] : memref<128x96xf32, #tpu.memory_space<vmem>>, vector<128x96xf32>
    %cst = arith.constant dense<0.000000e+00> : vector<1x96xf32>
    %2 = tpu.matmul %0, %1, %cst {dimension_numbers = #tpu.dot_dimension_numbers<[1], [0], [0], [1], [0, 0, 1, 1], [], []>} : vector<1x128xf32>, vector<128x96xf32>, vector<1x96xf32> -> vector<1x96xf32>
    %c0_3 = arith.constant 0 : index
    %c0_4 = arith.constant 0 : index
    %3 = vector.load %arg3[%c0_3, %c0_4] : memref<1x96xf32, #tpu.memory_space<vmem>>, vector<1x96xf32>
    %4 = arith.addf %2, %3 : vector<1x96xf32>
    %cst_5 = arith.constant 0.000000e+00 : f32
    %5 = vector.broadcast %cst_5 : f32 to vector<1x96xf32>
    %6 = arith.subf %5, %4 : vector<1x96xf32>
    %7 = math.exp %6 : vector<1x96xf32>
    %cst_6 = arith.constant 1.000000e+00 : f32
    %8 = vector.broadcast %cst_6 : f32 to vector<1x96xf32>
    %9 = arith.addf %8, %7 : vector<1x96xf32>
    %10 = tpu.reciprocal %9 {approx = true} : vector<1x96xf32> -> vector<1x96xf32>
    %c0_7 = arith.constant 0 : index
    %c0_8 = arith.constant 0 : index
    %11 = vector.load %arg4[%c0_7, %c0_8] : memref<96x64xf32, #tpu.memory_space<vmem>>, vector<96x64xf32>
    %cst_9 = arith.constant dense<0.000000e+00> : vector<1x64xf32>
    %12 = tpu.matmul %10, %11, %cst_9 {dimension_numbers = #tpu.dot_dimension_numbers<[1], [0], [0], [1], [0, 0, 1, 1], [], []>} : vector<1x96xf32>, vector<96x64xf32>, vector<1x64xf32> -> vector<1x64xf32>
    %c0_10 = arith.constant 0 : index
    %c0_11 = arith.constant 0 : index
    %13 = vector.load %arg5[%c0_10, %c0_11] : memref<1x64xf32, #tpu.memory_space<vmem>>, vector<1x64xf32>
    %14 = arith.addf %12, %13 : vector<1x64xf32>
    %cst_12 = arith.constant 0.000000e+00 : f32
    %15 = vector.broadcast %cst_12 : f32 to vector<1x64xf32>
    %16 = arith.subf %15, %14 : vector<1x64xf32>
    %17 = math.exp %16 : vector<1x64xf32>
    %cst_13 = arith.constant 1.000000e+00 : f32
    %18 = vector.broadcast %cst_13 : f32 to vector<1x64xf32>
    %19 = arith.addf %18, %17 : vector<1x64xf32>
    %20 = tpu.reciprocal %19 {approx = true} : vector<1x64xf32> -> vector<1x64xf32>
    %c0_14 = arith.constant 0 : index
    %c0_15 = arith.constant 0 : index
    %21 = vector.load %arg6[%c0_14, %c0_15] : memref<64x16xf32, #tpu.memory_space<vmem>>, vector<64x16xf32>
    %cst_16 = arith.constant dense<0.000000e+00> : vector<1x16xf32>
    %22 = tpu.matmul %20, %21, %cst_16 {dimension_numbers = #tpu.dot_dimension_numbers<[1], [0], [0], [1], [0, 0, 1, 1], [], []>} : vector<1x64xf32>, vector<64x16xf32>, vector<1x16xf32> -> vector<1x16xf32>
    %c0_17 = arith.constant 0 : index
    %c0_18 = arith.constant 0 : index
    %23 = vector.load %arg7[%c0_17, %c0_18] : memref<1x16xf32, #tpu.memory_space<vmem>>, vector<1x16xf32>
    %24 = arith.addf %22, %23 : vector<1x16xf32>
    %cst_19 = arith.constant 0.000000e+00 : f32
    %25 = vector.broadcast %cst_19 : f32 to vector<1x16xf32>
    %26 = arith.subf %25, %24 : vector<1x16xf32>
    %27 = math.exp %26 : vector<1x16xf32>
    %cst_20 = arith.constant 1.000000e+00 : f32
    %28 = vector.broadcast %cst_20 : f32 to vector<1x16xf32>
    %29 = arith.addf %28, %27 : vector<1x16xf32>
    %30 = tpu.reciprocal %29 {approx = true} : vector<1x16xf32> -> vector<1x16xf32>
    %c0_21 = arith.constant 0 : index
    %c0_22 = arith.constant 0 : index
    %31 = vector.load %arg8[%c0_21, %c0_22] : memref<1x16xf32, #tpu.memory_space<vmem>>, vector<1x16xf32>
    tpu.vector_store %arg8[%c0_21, %c0_22], %30 {strides = array<i32>} : memref<1x16xf32, #tpu.memory_space<vmem>>, vector<1x16xf32>,
    return
  }
  func.func @transform_0(%arg0: i32) -> (i32, i32) {
    %c0_i32 = arith.constant 0 : i32
    %c0_i32_0 = arith.constant 0 : i32
    return %arg0, %c0_i32 : i32, i32
  }
  func.func @transform_1(%arg0: i32) -> (i32, i32) {
    %c0_i32 = arith.constant 0 : i32
    %c0_i32_0 = arith.constant 0 : i32
    %c0_i32_1 = arith.constant 0 : i32
    return %c0_i32, %c0_i32_0 : i32, i32
  }
  func.func @transform_2(%arg0: i32) -> (i32, i32) {
    %c0_i32 = arith.constant 0 : i32
    %c0_i32_0 = arith.constant 0 : i32
    %c0_i32_1 = arith.constant 0 : i32
    return %c0_i32, %c0_i32_0 : i32, i32
  }
  func.func @transform_3(%arg0: i32) -> (i32, i32) {
    %c0_i32 = arith.constant 0 : i32
    %c0_i32_0 = arith.constant 0 : i32
    %c0_i32_1 = arith.constant 0 : i32
    return %c0_i32, %c0_i32_0 : i32, i32
  }
  func.func @transform_4(%arg0: i32) -> (i32, i32) {
    %c0_i32 = arith.constant 0 : i32
    %c0_i32_0 = arith.constant 0 : i32
    %c0_i32_1 = arith.constant 0 : i32
    return %c0_i32, %c0_i32_0 : i32, i32
  }
  func.func @transform_5(%arg0: i32) -> (i32, i32) {
    %c0_i32 = arith.constant 0 : i32
    %c0_i32_0 = arith.constant 0 : i32
    %c0_i32_1 = arith.constant 0 : i32
    return %c0_i32, %c0_i32_0 : i32, i32
  }
  func.func @transform_6(%arg0: i32) -> (i32, i32) {
    %c0_i32 = arith.constant 0 : i32
    %c0_i32_0 = arith.constant 0 : i32
    %c0_i32_1 = arith.constant 0 : i32
    return %c0_i32, %c0_i32_0 : i32, i32
  }
  func.func @transform_7(%arg0: i32) -> (i32, i32) {
    %c0_i32 = arith.constant 0 : i32
    %c0_i32_0 = arith.constant 0 : i32
    return %arg0, %c0_i32 : i32, i32
  }
}

</mosaic_0001>

<llo_original>
// kernel: tpu_custom_call.1
$region0: #{tpu_custom_call.1}
  #allocation0 [shape = 'u32[]', space=smem, size = 0x4, offset = 0x4, fixed_abs, tag = 'smem constant byte address 0x4 - core index']
  #allocation1 [shape = 'u32[72,128]{1,0:T(1,128)}', space=vmem, size = 0x9000, scoped, tag = 'internal scratch']
  %s0 = inlined_call_operand.vmem [shape: f32[1,128], index: 0, kind: input, shape index: {}]
  %s1 = inlined_call_operand.vmem [shape: f32[128,96], index: 1, kind: input, shape index: {}]
  %s2 = inlined_call_operand.vmem [shape: f32[1,96], index: 2, kind: input, shape index: {}]
  %s3 = inlined_call_operand.vmem [shape: f32[96,64], index: 3, kind: input, shape index: {}]
  %s4 = inlined_call_operand.vmem [shape: f32[1,64], index: 4, kind: input, shape index: {}]
  %s5 = inlined_call_operand.vmem [shape: f32[64,16], index: 5, kind: input, shape index: {}]
  %s6 = inlined_call_operand.vmem [shape: f32[1,16], index: 6, kind: input, shape index: {}]
  %s7 = inlined_call_operand.hbm [shape: f32[1,16], index: 7, kind: output, shape index: {}]
  %s8 = sld [smem:[#allocation0]]
  $region38: #{tpu_custom_call.1} parent=0
    _
  %s10 = ssub.s32 1, %s8
  %s11 = scalar_select 0, %s10, %s8
  $region1: #{tpu_custom_call.1} parent=0
    #allocation2 [shape = 'u8[512]{0}', space=vmem, size = 0x400, scoped, tag = 'output window, operand 0, single buffered']
    #allocation3 [shape = 's32[1]{0}', space=sflag, size = 0x4, scoped, tag = 'scoped memory for tpu_custom_call.1']
    %12 = vsyncpa [#allocation3], 0
    // Predicated region
    $region2: #{tpu_custom_call.1} parent=1 // pred_check
      _
    $region3: #{tpu_custom_call.1} parent=1 // pred_check_branch
      %14 = sbr.rel (0) target = $region5
    $region4: #{tpu_custom_call.1} parent=1 // pred_region
      _
    $region5: #{tpu_custom_call.1} parent=1 // pred_fallthru
      _
    // Predicated region
    $region6: #{tpu_custom_call.1} parent=1 // pred_check
      _
    $region7: #{tpu_custom_call.1} parent=1 // pred_check_branch
      %16 = sbr.rel (0) target = $region9
    $region8: #{tpu_custom_call.1} parent=1 // pred_region
      _
    $region9: #{tpu_custom_call.1} parent=1 // pred_fallthru
      _
    // Predicated region
    $region10: #{tpu_custom_call.1} parent=1 // pred_check
      _
    $region11: #{tpu_custom_call.1} parent=1 // pred_check_branch
      %18 = sbr.rel (0) target = $region13
    $region12: #{tpu_custom_call.1} parent=1 // pred_region
      _
    $region13: #{tpu_custom_call.1} parent=1 // pred_fallthru
      _
    // Predicated region
    $region14: #{tpu_custom_call.1} parent=1 // pred_check
      _
    $region15: #{tpu_custom_call.1} parent=1 // pred_check_branch
      %20 = sbr.rel (0) target = $region17
    $region16: #{tpu_custom_call.1} parent=1 // pred_region
      _
    $region17: #{tpu_custom_call.1} parent=1 // pred_fallthru
      _
    // Predicated region
    $region18: #{tpu_custom_call.1} parent=1 // pred_check
      _
    $region19: #{tpu_custom_call.1} parent=1 // pred_check_branch
      %22 = sbr.rel (0) target = $region21
    $region20: #{tpu_custom_call.1} parent=1 // pred_region
      _
    $region21: #{tpu_custom_call.1} parent=1 // pred_fallthru
      _
    // Predicated region
    $region22: #{tpu_custom_call.1} parent=1 // pred_check
      _
    $region23: #{tpu_custom_call.1} parent=1 // pred_check_branch
      %24 = sbr.rel (0) target = $region25
    $region24: #{tpu_custom_call.1} parent=1 // pred_region
      _
    $region25: #{tpu_custom_call.1} parent=1 // pred_fallthru
      _
    // Predicated region
    $region26: #{tpu_custom_call.1} parent=1 // pred_check
      _
    $region27: #{tpu_custom_call.1} parent=1 // pred_check_branch
      %26 = sbr.rel (0) target = $region29
    $region28: #{tpu_custom_call.1} parent=1 // pred_region
      _
    $region29: #{tpu_custom_call.1} parent=1 // pred_fallthru
      _
    %v27 = vld [vmem:[%s0] sm:$0x1]
    %v28 = vld [vmem:[%s1] sm:$0xff]
    %v29 = vld [vmem:[%s1 + $0x8] sm:$0xff]
    %v30 = vld [vmem:[%s1 + $0x10] sm:$0xff]
    %v31 = vld [vmem:[%s1 + $0x18] sm:$0xff]
    %v32 = vld [vmem:[%s1 + $0x20] sm:$0xff]
    %v33 = vld [vmem:[%s1 + $0x28] sm:$0xff]
    %v34 = vld [vmem:[%s1 + $0x30] sm:$0xff]
    %v35 = vld [vmem:[%s1 + $0x38] sm:$0xff]
    %v36 = vld [vmem:[%s1 + $0x40] sm:$0xff]
    %v37 = vld [vmem:[%s1 + $0x48] sm:$0xff]
    %v38 = vld [vmem:[%s1 + $0x50] sm:$0xff]
    %v39 = vld [vmem:[%s1 + $0x58] sm:$0xff]
    %v40 = vld [vmem:[%s1 + $0x60] sm:$0xff]
    %v41 = vld [vmem:[%s1 + $0x68] sm:$0xff]
    %v42 = vld [vmem:[%s1 + $0x70] sm:$0xff]
    %v43 = vld [vmem:[%s1 + $0x78] sm:$0xff]
    %v44 = vld [vmem:[%s2] sm:$0x1]
    %45 = vmatpush.msra.mxu0 %v43
    %46 = vmatpush.msra.mxu0 %v42
    %47 = vmatpush.msra.mxu0 %v41
    %48 = vmatpush.msra.mxu0 %v40
    %49 = vmatpush.msra.mxu0 %v39
    %50 = vmatpush.msra.mxu0 %v38
    %51 = vmatpush.msra.mxu0 %v37
    %52 = vmatpush.msra.mxu0 %v36
    %53 = vmatpush.msra.mxu0 %v35
    %54 = vmatpush.msra.mxu0 %v34
    %55 = vmatpush.msra.mxu0 %v33
    %56 = vmatpush.msra.mxu0 %v32
    %57 = vmatpush.msra.mxu0 %v31
    %58 = vmatpush.msra.mxu0 %v30
    %59 = vmatpush.msra.mxu0 %v29
    %60 = vmatpush.msra.mxu0 %v28
    %61 = vmatmul.f32.gmra.mxu0 %v27
    %v62 = vpop.f32.mrf.mxu0
    %v63 = vadd.f32 %v44, %v62
    %64 = vdwg.mxu0
    %v65 = vsub.f32 0.0, %v63
    %v66 = vmul.f32 %v65, 1.442695
    %v67 = vpow.pop %v66
    %v68 = vadd.f32 %v67, 1.0
    %v69 = vrcp.pop %v68
    %v70 = vld [vmem:[%s3] sm:$0xff]
    %v71 = vld [vmem:[%s3 + $0x8] sm:$0xff]
    %v72 = vld [vmem:[%s3 + $0x10] sm:$0xff]
    %v73 = vld [vmem:[%s3 + $0x18] sm:$0xff]
    %v74 = vld [vmem:[%s3 + $0x20] sm:$0xff]
    %v75 = vld [vmem:[%s3 + $0x28] sm:$0xff]
    %v76 = vld [vmem:[%s3 + $0x30] sm:$0xff]
    %v77 = vld [vmem:[%s3 + $0x38] sm:$0xff]
    %v78 = vld [vmem:[%s3 + $0x40] sm:$0xff]
    %v79 = vld [vmem:[%s3 + $0x48] sm:$0xff]
    %v80 = vld [vmem:[%s3 + $0x50] sm:$0xff]
    %v81 = vld [vmem:[%s3 + $0x58] sm:$0xff]
    %v82 = vld [vmem:[%s4] sm:$0x1]
    %vm83 = vcmask 785408
    %v85 = vsel %vm83, %v69, 0
    %87 = vmatpush.msra.mxu0 0.0
    %88 = vmatpush.msra.mxu0 0.0
    %89 = vmatpush.msra.mxu0 0.0
    %90 = vmatpush.msra.mxu0 0.0
    %91 = vmatpush.msra.mxu0 %v81
    %92 = vmatpush.msra.mxu0 %v80
    %93 = vmatpush.msra.mxu0 %v79
    %94 = vmatpush.msra.mxu0 %v78
    %95 = vmatpush.msra.mxu0 %v77
    %96 = vmatpush.msra.mxu0 %v76
    %97 = vmatpush.msra.mxu0 %v75
    %98 = vmatpush.msra.mxu0 %v74
    %99 = vmatpush.msra.mxu0 %v73
    %100 = vmatpush.msra.mxu0 %v72
    %101 = vmatpush.msra.mxu0 %v71
    %102 = vmatpush.msra.mxu0 %v70
    %103 = vmatmul.f32.gmra.mxu0 %v85
    %v104 = vpop.f32.mrf.mxu0
    %v105 = vadd.f32 %v82, %v104
    %106 = vdwg.mxu0
    %v107 = vsub.f32 0.0, %v105
    %v108 = vmul.f32 %v107, 1.442695
    %v109 = vpow.pop %v108
    %v110 = vadd.f32 %v109, 1.0
    %v111 = vrcp.pop %v110
    %v112 = vld [vmem:[%s5] sm:$0xff]
    %v113 = vld [vmem:[%s5 + $0x8] sm:$0xff]
    %v114 = vld [vmem:[%s5 + $0x10] sm:$0xff]
    %v115 = vld [vmem:[%s5 + $0x18] sm:$0xff]
    %v116 = vld [vmem:[%s5 + $0x20] sm:$0xff]
    %v117 = vld [vmem:[%s5 + $0x28] sm:$0xff]
    %v118 = vld [vmem:[%s5 + $0x30] sm:$0xff]
    %v119 = vld [vmem:[%s5 + $0x38] sm:$0xff]
    %v120 = vld [vmem:[%s6] sm:$0x1]
    %vm121 = vcmask 523264
    %v123 = vsel %vm121, %v111, 0
    %125 = vmatpush.msra.mxu0 0.0
    %126 = vmatpush.msra.mxu0 0.0
    %127 = vmatpush.msra.mxu0 0.0
    %128 = vmatpush.msra.mxu0 0.0
    %129 = vmatpush.msra.mxu0 0.0
    %130 = vmatpush.msra.mxu0 0.0
    %131 = vmatpush.msra.mxu0 0.0
    %132 = vmatpush.msra.mxu0 0.0
    %133 = vmatpush.msra.mxu0 %v119
    %134 = vmatpush.msra.mxu0 %v118
    %135 = vmatpush.msra.mxu0 %v117
    %136 = vmatpush.msra.mxu0 %v116
    %137 = vmatpush.msra.mxu0 %v115
    %138 = vmatpush.msra.mxu0 %v114
    %139 = vmatpush.msra.mxu0 %v113
    %140 = vmatpush.msra.mxu0 %v112
    %141 = vmatmul.f32.gmra.mxu0 %v123
    %v142 = vpop.f32.mrf.mxu0
    %v143 = vadd.f32 %v120, %v142
    %144 = vdwg.mxu0
    %v145 = vsub.f32 0.0, %v143
    %v146 = vmul.f32 %v145, 1.442695
    %v147 = vpow.pop %v146
    %v148 = vadd.f32 %v147, 1.0
    %v149 = vrcp.pop %v148
    %vm150 = vcmask 122880
    %151 = vst.msk [vmem:[#allocation2] sm:$0x1] %vm150, %v149
    // Predicated region
    $region30: #{tpu_custom_call.1} parent=1 // pred_check
      _
    $region31: #{tpu_custom_call.1} parent=1 // pred_check_branch
      %153 = sbr.rel (0) target = $region33
    $region32: #{tpu_custom_call.1} parent=1 // pred_region
      %155 = vsyncadd [#allocation3], 0
      %s157 = sshll.u32 [#allocation2], 4
      %s158 = int_to_ptr.vmem [resolvable:$true] %s157
      %s159 = sshll.u32 %s7, 4
      %s160 = int_to_ptr.hbm [resolvable:$true] %s159
      %162 = dma.vmem_to_hbm [thread:$0]  %s158, 16, %s160, [#allocation3]
    $region33: #{tpu_custom_call.1} parent=1 // pred_fallthru
      _
    // Predicated region
    $region34: #{tpu_custom_call.1} parent=1 // pred_check
      _
    $region35: #{tpu_custom_call.1} parent=1 // pred_check_branch
      %164 = sbr.rel (0) target = $region37
    $region36: #{tpu_custom_call.1} parent=1 // pred_region
      %166 = dma.done [#allocation3], 16
    $region37: #{tpu_custom_call.1} parent=1 // pred_fallthru
      _
    %167 = vsyncpa [#allocation3], 1

</llo_original>
